<compile_context>
chip_gen: v6e
topology: v6e:2x2x1
jax: 0.10.0
libtpu: 0.0.40
codegen_flags: <defaults>
</compile_context>

<pallas_src>
import functools

import jax
import jax.numpy as jnp
from jax import lax
from jax.experimental import pallas as pl
from jax.experimental.pallas import tpu as pltpu


def _round_up(x, m):
    return ((x + m - 1) // m) * m


# ----------------------------------------------------------------------------
# JAX glue: modulated deformable im2col (DCNv2 bilinear sampling + modulation)
# ----------------------------------------------------------------------------
def modulated_deform_im2col(x, offset, mask, *, stride=1, pad=1, dilation=1,
                            ksize=3, out_dtype=jnp.float32):
    """x: (B,H,W,Cin) NHWC.  offset: (B,Ho,Wo,2*K*K) as (dy,dx) pairs per tap.
    mask: (B,Ho,Wo,K*K) (already sigmoid'ed by the caller, as in DyHead).
    Returns cols: (B, Ho*Wo, K*K*Cin), tap-major / channel-minor, in out_dtype
    (bf16 in the kernel path so the HBM write is halved)."""
    B, H, W, Cin = x.shape
    Ho, Wo = offset.shape[1], offset.shape[2]
    K = ksize
    KK = K * K

    hs = jnp.arange(Ho, dtype=jnp.float32) * stride - pad            # (Ho,)
    ws = jnp.arange(Wo, dtype=jnp.float32) * stride - pad            # (Wo,)
    ky, kx = jnp.meshgrid(jnp.arange(K, dtype=jnp.float32) * dilation,
                          jnp.arange(K, dtype=jnp.float32) * dilation,
                          indexing="ij")
    ky = ky.reshape(-1)                                              # (KK,)
    kx = kx.reshape(-1)

    off = offset.reshape(B, Ho, Wo, KK, 2)
    py = hs[None, :, None, None] + ky[None, None, None, :] + off[..., 0]   # (B,Ho,Wo,KK)
    px = ws[None, None, :, None] + kx[None, None, None, :] + off[..., 1]

    y0f = jnp.floor(py)
    x0f = jnp.floor(px)
    ly = py - y0f
    lx = px - x0f
    y0 = y0f.astype(jnp.int32)
    x0 = x0f.astype(jnp.int32)

    b_idx = jnp.arange(B)[:, None, None, None]

    def gather(yi, xi):
        valid = (yi >= 0) & (yi < H) & (xi >= 0) & (xi < W)
        yc = jnp.clip(yi, 0, H - 1)
        xc = jnp.clip(xi, 0, W - 1)
        v = x[b_idx, yc, xc, :]                                       # (B,Ho,Wo,KK,Cin)
        return v * valid[..., None].astype(x.dtype)

    v00 = gather(y0, x0)
    v01 = gather(y0, x0 + 1)
    v10 = gather(y0 + 1, x0)
    v11 = gather(y0 + 1, x0 + 1)

    w00 = ((1.0 - ly) * (1.0 - lx))[..., None]
    w01 = ((1.0 - ly) * lx)[..., None]
    w10 = (ly * (1.0 - lx))[..., None]
    w11 = (ly * lx)[..., None]

    samp = v00 * w00 + v01 * w01 + v10 * w10 + v11 * w11              # (B,Ho,Wo,KK,Cin)
    samp = samp * mask[..., None]                                     # modulation
    return samp.reshape(B, Ho * Wo, KK * Cin).astype(out_dtype)


# ----------------------------------------------------------------------------
# PASS 1: im2col matmul (bf16 -> f32 acc) + per-channel moments + GN affine
# ----------------------------------------------------------------------------
def _conv_stats_kernel(cols_ref, w_ref, bias_ref, gamma_ref, beta_ref,
                       gmat_ref, gmatT_ref, y_ref, affine_ref,
                       sum_ref, sumsq_ref, *, hw_valid, eps, cpg_real):
    # cols_ref : (tile, 9*Cin)   bf16 streamed spatial tile of im2col columns
    # w_ref    : (9*Cin, Cout_pad) bf16
    # bias/gamma/beta : (1, Cout_pad) f32
    # gmat_ref : (Cout_pad, G) one-hot group membership ; gmatT_ref: (G, Cout_pad)
    # y_ref    : (tile, Cout_pad) f32   conv output tile (bias-free), streamed to HBM
    # affine_ref : (2, Cout_pad)  f32   [scale; shift] written at the last tile
    # sum_ref / sumsq_ref : (1, Cout_pad) f32 per-channel moment accumulators
    #
    # NOTE: the scratch accumulators persist across the whole grid; correctness
    # requires the spatial-tile axis (grid axis 1) to stay innermost/sequential
    # ("arbitrary") so this t==0 re-init runs at the start of every batch elem.
    t = pl.program_id(1)
    num_t = pl.num_programs(1)

    @pl.when(t == 0)
    def _init():
        sum_ref[...] = jnp.zeros_like(sum_ref)
        sumsq_ref[...] = jnp.zeros_like(sumsq_ref)

    # Single big-K matmul (9*Cin contraction) on the MXU, f32 accumulation.
    y = jnp.dot(cols_ref[...], w_ref[...], preferred_element_type=jnp.float32)

    # Bias is deferred to finalize, so zero-padded spatial rows contribute
    # exactly 0 here -> no per-tile masking / iota needed.
    sum_ref[...] += jnp.sum(y, axis=0, keepdims=True)
    sumsq_ref[...] += jnp.sum(y * y, axis=0, keepdims=True)

    y_ref[...] = y

    @pl.when(t == num_t - 1)
    def _finalize():
        count = float(hw_valid * cpg_real)
        b = bias_ref[...]
        # Fold the deferred conv bias into the per-channel moments analytically.
        s_c = sum_ref[...] + hw_valid * b
        ss_c = sumsq_ref[...] + 2.0 * b * sum_ref[...] + hw_valid * (b * b)
        # channel moments -> group moments via one-hot matmul (avoids reshapes)
        g_sum = jnp.dot(s_c, gmat_ref[...], preferred_element_type=jnp.float32)
        g_ss = jnp.dot(ss_c, gmat_ref[...], preferred_element_type=jnp.float32)
        mean_g = g_sum / count
        var_g = jnp.maximum(g_ss / count - mean_g * mean_g, 0.0)       # clamp: E[x^2]-E[x]^2 cancellation
        rstd_g = lax.rsqrt(var_g + eps)                                # EUP
        # broadcast group stats back to channels
        mean_c = jnp.dot(mean_g, gmatT_ref[...], preferred_element_type=jnp.float32)
        rstd_c = jnp.dot(rstd_g, gmatT_ref[...], preferred_element_type=jnp.float32)
        scale_c = rstd_c * gamma_ref[...]
        shift_c = beta_ref[...] + (b - mean_c) * scale_c
        affine_ref[0:1, :] = scale_c
        affine_ref[1:2, :] = shift_c


# ----------------------------------------------------------------------------
# PASS 2: cheap elementwise normalize  out = y * scale + shift
# ----------------------------------------------------------------------------
def _apply_affine_kernel(y_ref, affine_ref, o_ref):
    scale = affine_ref[0:1, :]
    shift = affine_ref[1:2, :]
    o_ref[...] = (y_ref[...] * scale + shift).astype(o_ref.dtype)


def _deform_matmul_groupnorm(cols, w_mat, bias, gamma, beta, *,
                             num_groups, eps=1e-5, tile=None):
    """cols: (B, HW, 9*Cin) (any float dtype; cast to bf16 here).
    w_mat: (9*Cin, Cout).  Returns (B, HW, Cout) f32."""
    B, HW, KC = cols.shape
    Cout = w_mat.shape[1]
    assert Cout % num_groups == 0, (Cout, num_groups)
    cpg = Cout // num_groups

    # bf16 inputs, f32 accumulation (halves HBM traffic; avoids f32 MXU
    # emulation on v5e).
    cols = cols.astype(jnp.bfloat16)
    w_mat = w_mat.astype(jnp.bfloat16)

    # Lane-dense output channels: pad Cout to a multiple of 128 so output
    # stores are unmasked full-lane vst (padded channels produce zeros and are
    # sliced off at the end; production Cout=256 needs no padding).
    Cout_pad = max(_round_up(Cout, 128), 128)

    # Spatial tile: default large (amortizes ~0.35us per-step overhead),
    # preferring a tile that divides HW so the big cols tensor is never padded.
    if tile is None:
        tile = 1024
    tile = max(8, _round_up(min(tile, _round_up(HW, 8)), 8))
    if HW % tile != 0:
        for cand in range(tile, 7, -8):
            if HW % cand == 0:
                tile = cand
                break
    HW_pad = _round_up(HW, tile)
    if HW_pad != HW:
        # TODO(synk): pick per-FPN-level tiles dividing HW so this pad (a full
        # rewrite of the largest tensor) never materializes.
        cols = jnp.pad(cols, ((0, 0), (0, HW_pad - HW), (0, 0)))
    num_tiles = HW_pad // tile

    if Cout_pad != Cout:
        w_mat = jnp.pad(w_mat, ((0, 0), (0, Cout_pad - Cout)))
        bias = jnp.pad(bias, (0, Cout_pad - Cout))
        gamma = jnp.pad(gamma, (0, Cout_pad - Cout))
        beta = jnp.pad(beta, (0, Cout_pad - Cout))

    # One-hot channel->group membership; zero rows/cols for padded channels so
    # they never contribute to (or receive) group statistics.
    ch = jnp.arange(Cout_pad)
    grp = ch // cpg
    in_range = ch < Cout
    gmat = ((grp[:, None] == jnp.arange(num_groups)[None, :])
            & in_range[:, None]).astype(jnp.float32)                  # (Cout_pad, G)
    gmatT = jnp.transpose(gmat)                                        # (G, Cout_pad)

    bias2 = bias.reshape(1, Cout_pad).astype(jnp.float32)
    gamma2 = gamma.reshape(1, Cout_pad).astype(jnp.float32)
    beta2 = beta.reshape(1, Cout_pad).astype(jnp.float32)

    # Explicit scoped-VMEM budget (defaults are 16/32 MiB even on 128 MiB chips).
    est = (2 * tile * KC * 2            # double-buffered cols tile (bf16)
           + KC * Cout_pad * 2          # single-buffered weight (bf16)
           + 2 * tile * Cout_pad * 4    # double-buffered y output tile (f32)
           + 32 * Cout_pad * 4)         # constants / affine / scratch (generous)
    vmem_limit = int(min(max(2 * est, 32 * 1024 * 1024), 100 * 1024 * 1024))

    kernel1 = functools.partial(_conv_stats_kernel, hw_valid=HW, eps=eps,
                                cpg_real=cpg)

    def const_spec(shape):
        # Constant-index blocks: single-buffer them (no point double-buffering
        # a block whose index never changes; frees VMEM for bigger cols tiles).
        return pl.BlockSpec(shape, lambda b, t: (0, 0),
                            pipeline_mode=pl.Buffered(1))

    y_conv, affine = pl.pallas_call(
        kernel1,
        out_shape=(jax.ShapeDtypeStruct((B, HW_pad, Cout_pad), jnp.float32),
                   jax.ShapeDtypeStruct((B, 2, Cout_pad), jnp.float32)),
        grid_spec=pltpu.PrefetchScalarGridSpec(
            num_scalar_prefetch=0,
            grid=(B, num_tiles),
            in_specs=[
                pl.BlockSpec((None, tile, KC), lambda b, t: (b, t, 0)),
                const_spec((KC, Cout_pad)),
                const_spec((1, Cout_pad)),
                const_spec((1, Cout_pad)),
                const_spec((1, Cout_pad)),
                const_spec((Cout_pad, num_groups)),
                const_spec((num_groups, Cout_pad)),
            ],
            out_specs=[
                # tile-streamed conv output (no whole-image VMEM residency)
                pl.BlockSpec((None, tile, Cout_pad), lambda b, t: (b, t, 0)),
                # per-batch [scale; shift], written at the last tile only
                pl.BlockSpec((None, 2, Cout_pad), lambda b, t: (b, 0, 0)),
            ],
            scratch_shapes=[pltpu.VMEM((1, Cout_pad), jnp.float32),
                            pltpu.VMEM((1, Cout_pad), jnp.float32)],
        ),
        compiler_params=pltpu.CompilerParams(
            # batch parallel (megacore); spatial tiles are the GN reduction axis
            dimension_semantics=("parallel", "arbitrary"),
            vmem_limit_bytes=vmem_limit),
    )(cols, w_mat, bias2, gamma2, beta2, gmat, gmatT)

    out = pl.pallas_call(
        _apply_affine_kernel,
        out_shape=jax.ShapeDtypeStruct((B, HW_pad, Cout_pad), jnp.float32),
        grid_spec=pltpu.PrefetchScalarGridSpec(
            num_scalar_prefetch=0,
            grid=(B, num_tiles),
            in_specs=[
                pl.BlockSpec((None, tile, Cout_pad), lambda b, t: (b, t, 0)),
                pl.BlockSpec((None, 2, Cout_pad), lambda b, t: (b, 0, 0)),
            ],
            out_specs=pl.BlockSpec((None, tile, Cout_pad), lambda b, t: (b, t, 0)),
        ),
        compiler_params=pltpu.CompilerParams(
            dimension_semantics=("parallel", "parallel"),
            vmem_limit_bytes=vmem_limit),
    )(y_conv, affine)

    return out[:, :HW, :Cout]


# ----------------------------------------------------------------------------
# Conv3x3Norm forward (PyTorch-facing NCHW layout)
# ----------------------------------------------------------------------------
def conv3x3norm_forward(x_nchw, offset_nchw, mask_nchw, params, *,
                        stride=1, num_groups=16, eps=1e-5, tile=None,
                        compute_dtype=jnp.bfloat16):
    """x: (B,Cin,H,W); offset: (B,18,Ho,Wo); mask: (B,9,Ho,Wo) (sigmoid'ed).
    params: w (3,3,Cin,Cout) HWIO, bias (Cout,), gamma (Cout,), beta (Cout,)."""
    x = jnp.transpose(x_nchw, (0, 2, 3, 1))
    offset = jnp.transpose(offset_nchw, (0, 2, 3, 1))
    mask = jnp.transpose(mask_nchw, (0, 2, 3, 1))
    B, H, W, Cin = x.shape
    Ho, Wo = offset.shape[1], offset.shape[2]

    cols = modulated_deform_im2col(x, offset, mask, stride=stride,
                                   out_dtype=compute_dtype)           # (B,Ho*Wo,9*Cin) bf16
    w = params["w"]
    Cout = w.shape[-1]
    w_mat = w.reshape(9 * Cin, Cout).astype(compute_dtype)

    y = _deform_matmul_groupnorm(cols, w_mat, params["bias"], params["gamma"],
                                 params["beta"], num_groups=num_groups,
                                 eps=eps, tile=tile)
    y = y.reshape(B, Ho, Wo, Cout)
    return jnp.transpose(y, (0, 3, 1, 2))                             # NCHW


# ----------------------------------------------------------------------------
# Pure-JAX references (correctness checks, f32)
# ----------------------------------------------------------------------------
def _group_norm_ref(y, gamma, beta, num_groups, eps):
    B, HW, C = y.shape
    cpg = C // num_groups
    yr = y.reshape(B, HW, num_groups, cpg)
    mean = yr.mean(axis=(1, 3), keepdims=True)
    var = yr.var(axis=(1, 3), keepdims=True)
    yn = ((yr - mean) / jnp.sqrt(var + eps)).reshape(B, HW, C)
    return yn * gamma[None, None, :] + beta[None, None, :]


def conv3x3norm_ref(x_nchw, offset_nchw, mask_nchw, params, *,
                    stride=1, num_groups=16, eps=1e-5):
    x = jnp.transpose(x_nchw, (0, 2, 3, 1))
    offset = jnp.transpose(offset_nchw, (0, 2, 3, 1))
    mask = jnp.transpose(mask_nchw, (0, 2, 3, 1))
    B, H, W, Cin = x.shape
    Ho, Wo = offset.shape[1], offset.shape[2]
    cols = modulated_deform_im2col(x, offset, mask, stride=stride)    # f32
    w_mat = params["w"].reshape(9 * Cin, -1)
    Cout = w_mat.shape[1]
    y = jnp.einsum("bpk,kc->bpc", cols, w_mat) + params["bias"][None, None, :]
    y = _group_norm_ref(y, params["gamma"], params["beta"], num_groups, eps)
    return jnp.transpose(y.reshape(B, Ho, Wo, Cout), (0, 3, 1, 2))


def plain_conv_gn_ref(x_nchw, params, *, stride=1, num_groups=16, eps=1e-5):
    # zero offsets + unit mask must reduce the deformable conv to a plain conv
    x = jnp.transpose(x_nchw, (0, 2, 3, 1))
    y = lax.conv_general_dilated(
        x, params["w"], window_strides=(stride, stride),
        padding=((1, 1), (1, 1)),
        dimension_numbers=("NHWC", "HWIO", "NHWC"))
    y = y + params["bias"][None, None, None, :]
    B, Ho, Wo, Cout = y.shape
    y = _group_norm_ref(y.reshape(B, Ho * Wo, Cout), params["gamma"],
                        params["beta"], num_groups, eps)
    return jnp.transpose(y.reshape(B, Ho, Wo, Cout), (0, 3, 1, 2))


# ----------------------------------------------------------------------------
if __name__ == "__main__":
    B, Cin, H, W = 2, 16, 16, 16
    Cout, num_groups = 32, 16                      # GroupNorm(16) needs Cout % 16 == 0
    stride = 1

    key = jax.random.PRNGKey(0)
    k = jax.random.split(key, 8)

    x = jax.random.normal(k[0], (B, Cin, H, W), jnp.float32)
    Ho = (H - 1) // stride + 1
    Wo = (W - 1) // stride + 1
    offset = 0.5 * jax.random.normal(k[1], (B, 18, Ho, Wo), jnp.float32)
    mask = jax.nn.sigmoid(jax.random.normal(k[2], (B, 9, Ho, Wo), jnp.float32))

    params = dict(
        w=0.1 * jax.random.normal(k[3], (3, 3, Cin, Cout), jnp.float32),
        bias=0.05 * jax.random.normal(k[4], (Cout,), jnp.float32),
        gamma=1.0 + 0.05 * jax.random.normal(k[5], (Cout,), jnp.float32),
        beta=0.05 * jax.random.normal(k[6], (Cout,), jnp.float32),
    )

    # Main check: random offsets/mask, multi-tile spatial streaming
    # (tile=64 -> 4 tiles). bf16 cols/weights with f32 accumulation ->
    # loosened tolerance vs the f32 reference.
    out = jax.block_until_ready(
        conv3x3norm_forward(x, offset, mask, params, stride=stride,
                            num_groups=num_groups, tile=64))
    assert out.shape == (B, Cout, Ho, Wo), out.shape
    ref = jax.block_until_ready(
        conv3x3norm_ref(x, offset, mask, params, stride=stride,
                        num_groups=num_groups))
    err = float(jnp.max(jnp.abs(out - ref)))
    assert err < 5e-2, err

    # Semantic sanity: zero offsets + unit mask == plain 3x3 conv + GroupNorm
    # (default tile -> single spatial tile).
    out0 = jax.block_until_ready(
        conv3x3norm_forward(x, jnp.zeros_like(offset), jnp.ones_like(mask),
                            params, stride=stride, num_groups=num_groups))
    ref0 = jax.block_until_ready(
        plain_conv_gn_ref(x, params, stride=stride, num_groups=num_groups))
    err0 = float(jnp.max(jnp.abs(out0 - ref0)))
    assert err0 < 5e-2, err0

    # Stride-2 path (DyHead downsample branch), single-tile grid.
    Ho2 = (H - 1) // 2 + 1
    Wo2 = (W - 1) // 2 + 1
    offset2 = 0.5 * jax.random.normal(k[7], (B, 18, Ho2, Wo2), jnp.float32)
    mask2 = jax.nn.sigmoid(jax.random.normal(k[1], (B, 9, Ho2, Wo2), jnp.float32))
    out2 = jax.block_until_ready(
        conv3x3norm_forward(x, offset2, mask2, params, stride=2,
                            num_groups=num_groups))
    ref2 = jax.block_until_ready(
        conv3x3norm_ref(x, offset2, mask2, params, stride=2,
                        num_groups=num_groups))
    assert out2.shape == (B, Cout, Ho2, Wo2), out2.shape
    err2 = float(jnp.max(jnp.abs(out2 - ref2)))
    assert err2 < 5e-2, err2

    print("KERNEL_OK")
</pallas_src>

<mosaic_0001>
module attributes {stable_mosaic.version = 11 : i64} {
  func.func @_conv_stats_kernel(%arg0: i32, %arg1: i32, %arg2: memref<1x64x144xbf16, #tpu.memory_space<vmem>>, %arg3: memref<144x128xbf16, #tpu.memory_space<vmem>>, %arg4: memref<1x128xf32, #tpu.memory_space<vmem>>, %arg5: memref<1x128xf32, #tpu.memory_space<vmem>>, %arg6: memref<1x128xf32, #tpu.memory_space<vmem>>, %arg7: memref<128x16xf32, #tpu.memory_space<vmem>>, %arg8: memref<16x128xf32, #tpu.memory_space<vmem>>, %arg9: memref<1x64x128xf32, #tpu.memory_space<vmem>>, %arg10: memref<1x2x128xf32, #tpu.memory_space<vmem>>, %arg11: memref<1x128xf32, #tpu.memory_space<vmem>>, %arg12: memref<1x128xf32, #tpu.memory_space<vmem>>) attributes {dimension_semantics = [#tpu.dimension_semantics<parallel>, #tpu.dimension_semantics<arbitrary>], iteration_bounds = array<i64: 2, 4>, scalar_prefetch = 0 : i64, scratch_operands = 2 : i64, tpu.core_type = #tpu.core_type<tc>, window_params = [{transform_indices = @transform_0, window_bounds = array<i64: 1, 64, 144>}, {pipeline_mode = #tpu.pipeline_mode<synchronous>, transform_indices = @transform_1, window_bounds = array<i64: 144, 128>}, {pipeline_mode = #tpu.pipeline_mode<synchronous>, transform_indices = @transform_2, window_bounds = array<i64: 1, 128>}, {pipeline_mode = #tpu.pipeline_mode<synchronous>, transform_indices = @transform_3, window_bounds = array<i64: 1, 128>}, {pipeline_mode = #tpu.pipeline_mode<synchronous>, transform_indices = @transform_4, window_bounds = array<i64: 1, 128>}, {pipeline_mode = #tpu.pipeline_mode<synchronous>, transform_indices = @transform_5, window_bounds = array<i64: 128, 16>}, {pipeline_mode = #tpu.pipeline_mode<synchronous>, transform_indices = @transform_6, window_bounds = array<i64: 16, 128>}, {transform_indices = @transform_7, window_bounds = array<i64: 1, 64, 128>}, {transform_indices = @transform_8, window_bounds = array<i64: 1, 2, 128>}]} {
    %c0_i32 = arith.constant 0 : i32
    %0 = arith.cmpi eq, %arg1, %c0_i32 : i32
    %1 = arith.extui %0 : i1 to i32
    %c0_i32_0 = arith.constant 0 : i32
    %2 = arith.cmpi ne, %1, %c0_i32_0 : i32
    scf.if %2 {
      %cst_19 = arith.constant 0.000000e+00 : f32
      %24 = vector.broadcast %cst_19 : f32 to vector<1x128xf32>
      %c0_20 = arith.constant 0 : index
      %c0_21 = arith.constant 0 : index
      %25 = vector.load %arg11[%c0_20, %c0_21] : memref<1x128xf32, #tpu.memory_space<vmem>>, vector<1x128xf32>
      tpu.vector_store %arg11[%c0_20, %c0_21], %24 {strides = array<i32>} : memref<1x128xf32, #tpu.memory_space<vmem>>, vector<1x128xf32>,
      %cst_22 = arith.constant 0.000000e+00 : f32
      %26 = vector.broadcast %cst_22 : f32 to vector<1x128xf32>
      %c0_23 = arith.constant 0 : index
      %c0_24 = arith.constant 0 : index
      %27 = vector.load %arg12[%c0_23, %c0_24] : memref<1x128xf32, #tpu.memory_space<vmem>>, vector<1x128xf32>
      tpu.vector_store %arg12[%c0_23, %c0_24], %26 {strides = array<i32>} : memref<1x128xf32, #tpu.memory_space<vmem>>, vector<1x128xf32>,
    } else {
    }
    %c0 = arith.constant 0 : index
    %c0_1 = arith.constant 0 : index
    %c0_2 = arith.constant 0 : index
    %3 = vector.load %arg2[%c0, %c0_1, %c0_2] : memref<1x64x144xbf16, #tpu.memory_space<vmem>>, vector<1x64x144xbf16>
    %4 = vector.shape_cast %3 : vector<1x64x144xbf16> to vector<64x144xbf16>
    %c0_3 = arith.constant 0 : index
    %c0_4 = arith.constant 0 : index
    %5 = vector.load %arg3[%c0_3, %c0_4] : memref<144x128xbf16, #tpu.memory_space<vmem>>, vector<144x128xbf16>
    %cst = arith.constant dense<0.000000e+00> : vector<64x128xf32>
    %6 = tpu.matmul %4, %5, %cst {dimension_numbers = #tpu.dot_dimension_numbers<[1], [0], [0], [1], [0, 0, 1, 1], [], []>} : vector<64x144xbf16>, vector<144x128xbf16>, vector<64x128xf32> -> vector<64x128xf32>
    %c0_5 = arith.constant 0 : index
    %c0_6 = arith.constant 0 : index
    %7 = vector.load %arg11[%c0_5, %c0_6] : memref<1x128xf32, #tpu.memory_space<vmem>>, vector<1x128xf32>
    %cst_7 = arith.constant dense<0.000000e+00> : vector<128xf32>
    %8 = vector.multi_reduction <add>, %6, %cst_7 [0] : vector<64x128xf32> to vector<128xf32>
    %9 = vector.shape_cast %8 : vector<128xf32> to vector<1x128xf32>
    %10 = arith.addf %7, %9 : vector<1x128xf32>
    %c0_8 = arith.constant 0 : index
    %c0_9 = arith.constant 0 : index
    %11 = vector.load %arg11[%c0_8, %c0_9] : memref<1x128xf32, #tpu.memory_space<vmem>>, vector<1x128xf32>
    tpu.vector_store %arg11[%c0_8, %c0_9], %10 {strides = array<i32>} : memref<1x128xf32, #tpu.memory_space<vmem>>, vector<1x128xf32>,
    %c0_10 = arith.constant 0 : index
    %c0_11 = arith.constant 0 : index
    %12 = vector.load %arg12[%c0_10, %c0_11] : memref<1x128xf32, #tpu.memory_space<vmem>>, vector<1x128xf32>
    %13 = arith.mulf %6, %6 : vector<64x128xf32>
    %cst_12 = arith.constant dense<0.000000e+00> : vector<128xf32>
    %14 = vector.multi_reduction <add>, %13, %cst_12 [0] : vector<64x128xf32> to vector<128xf32>
    %15 = vector.shape_cast %14 : vector<128xf32> to vector<1x128xf32>
    %16 = arith.addf %12, %15 : vector<1x128xf32>
    %c0_13 = arith.constant 0 : index
    %c0_14 = arith.constant 0 : index
    %17 = vector.load %arg12[%c0_13, %c0_14] : memref<1x128xf32, #tpu.memory_space<vmem>>, vector<1x128xf32>
    tpu.vector_store %arg12[%c0_13, %c0_14], %16 {strides = array<i32>} : memref<1x128xf32, #tpu.memory_space<vmem>>, vector<1x128xf32>,
    %c0_15 = arith.constant 0 : index
    %c0_16 = arith.constant 0 : index
    %c0_17 = arith.constant 0 : index
    %18 = vector.load %arg9[%c0_15, %c0_16, %c0_17] : memref<1x64x128xf32, #tpu.memory_space<vmem>>, vector<1x64x128xf32>
    %19 = vector.shape_cast %18 : vector<1x64x128xf32> to vector<64x128xf32>
    %20 = vector.shape_cast %6 : vector<64x128xf32> to vector<1x64x128xf32>
    tpu.vector_store %arg9[%c0_15, %c0_16, %c0_17], %20 {strides = array<i32>} : memref<1x64x128xf32, #tpu.memory_space<vmem>>, vector<1x64x128xf32>,
    %c3_i32 = arith.constant 3 : i32
    %21 = arith.cmpi eq, %arg1, %c3_i32 : i32
    %22 = arith.extui %21 : i1 to i32
    %c0_i32_18 = arith.constant 0 : i32
    %23 = arith.cmpi ne, %22, %c0_i32_18 : i32
    scf.if %23 {
      %c0_19 = arith.constant 0 : index
      %c0_20 = arith.constant 0 : index
      %24 = vector.load %arg4[%c0_19, %c0_20] : memref<1x128xf32, #tpu.memory_space<vmem>>, vector<1x128xf32>
      %c0_21 = arith.constant 0 : index
      %c0_22 = arith.constant 0 : index
      %25 = vector.load %arg11[%c0_21, %c0_22] : memref<1x128xf32, #tpu.memory_space<vmem>>, vector<1x128xf32>
      %cst_23 = arith.constant 2.560000e+02 : f32
      %26 = vector.broadcast %cst_23 : f32 to vector<1x128xf32>
      %27 = arith.mulf %26, %24 : vector<1x128xf32>
      %28 = arith.addf %25, %27 : vector<1x128xf32>
      %c0_24 = arith.constant 0 : index
      %c0_25 = arith.constant 0 : index
      %29 = vector.load %arg12[%c0_24, %c0_25] : memref<1x128xf32, #tpu.memory_space<vmem>>, vector<1x128xf32>
      %cst_26 = arith.constant 2.000000e+00 : f32
      %30 = vector.broadcast %cst_26 : f32 to vector<1x128xf32>
      %31 = arith.mulf %30, %24 : vector<1x128xf32>
      %c0_27 = arith.constant 0 : index
      %c0_28 = arith.constant 0 : index
      %32 = vector.load %arg11[%c0_27, %c0_28] : memref<1x128xf32, #tpu.memory_space<vmem>>, vector<1x128xf32>
      %33 = arith.mulf %31, %32 : vector<1x128xf32>
      %34 = arith.addf %29, %33 : vector<1x128xf32>
      %35 = arith.mulf %24, %24 : vector<1x128xf32>
      %cst_29 = arith.constant 2.560000e+02 : f32
      %36 = vector.broadcast %cst_29 : f32 to vector<1x128xf32>
      %37 = arith.mulf %36, %35 : vector<1x128xf32>
      %38 = arith.addf %34, %37 : vector<1x128xf32>
      %c0_30 = arith.constant 0 : index
      %c0_31 = arith.constant 0 : index
      %39 = vector.load %arg7[%c0_30, %c0_31] : memref<128x16xf32, #tpu.memory_space<vmem>>, vector<128x16xf32>
      %cst_32 = arith.constant dense<0.000000e+00> : vector<1x16xf32>
      %40 = tpu.matmul %28, %39, %cst_32 {dimension_numbers = #tpu.dot_dimension_numbers<[1], [0], [0], [1], [0, 0, 1, 1], [], []>} : vector<1x128xf32>, vector<128x16xf32>, vector<1x16xf32> -> vector<1x16xf32>
      %c0_33 = arith.constant 0 : index
      %c0_34 = arith.constant 0 : index
      %41 = vector.load %arg7[%c0_33, %c0_34] : memref<128x16xf32, #tpu.memory_space<vmem>>, vector<128x16xf32>
      %cst_35 = arith.constant dense<0.000000e+00> : vector<1x16xf32>
      %42 = tpu.matmul %38, %41, %cst_35 {dimension_numbers = #tpu.dot_dimension_numbers<[1], [0], [0], [1], [0, 0, 1, 1], [], []>} : vector<1x128xf32>, vector<128x16xf32>, vector<1x16xf32> -> vector<1x16xf32>
      %cst_36 = arith.constant 5.120000e+02 : f32
      %43 = vector.broadcast %cst_36 : f32 to vector<1x16xf32>
      %44 = arith.divf %40, %43 : vector<1x16xf32>
      %cst_37 = arith.constant 5.120000e+02 : f32
      %45 = vector.broadcast %cst_37 : f32 to vector<1x16xf32>
      %46 = arith.divf %42, %45 : vector<1x16xf32>
      %47 = arith.mulf %44, %44 : vector<1x16xf32>
      %48 = arith.subf %46, %47 : vector<1x16xf32>
      %cst_38 = arith.constant 0.000000e+00 : f32
      %49 = vector.broadcast %cst_38 : f32 to vector<1x16xf32>
      %50 = arith.maximumf %48, %49 : vector<1x16xf32>
      %cst_39 = arith.constant 9.99999974E-6 : f32
      %51 = vector.broadcast %cst_39 : f32 to vector<1x16xf32>
      %52 = arith.addf %50, %51 : vector<1x16xf32>
      %53 = math.rsqrt %52 : vector<1x16xf32>
      %c0_40 = arith.constant 0 : index
      %c0_41 = arith.constant 0 : index
      %54 = vector.load %arg8[%c0_40, %c0_41] : memref<16x128xf32, #tpu.memory_space<vmem>>, vector<16x128xf32>
      %cst_42 = arith.constant dense<0.000000e+00> : vector<1x128xf32>
      %55 = tpu.matmul %44, %54, %cst_42 {dimension_numbers = #tpu.dot_dimension_numbers<[1], [0], [0], [1], [0, 0, 1, 1], [], []>} : vector<1x16xf32>, vector<16x128xf32>, vector<1x128xf32> -> vector<1x128xf32>
      %c0_43 = arith.constant 0 : index
      %c0_44 = arith.constant 0 : index
      %56 = vector.load %arg8[%c0_43, %c0_44] : memref<16x128xf32, #tpu.memory_space<vmem>>, vector<16x128xf32>
      %cst_45 = arith.constant dense<0.000000e+00> : vector<1x128xf32>
      %57 = tpu.matmul %53, %56, %cst_45 {dimension_numbers = #tpu.dot_dimension_numbers<[1], [0], [0], [1], [0, 0, 1, 1], [], []>} : vector<1x16xf32>, vector<16x128xf32>, vector<1x128xf32> -> vector<1x128xf32>
      %c0_46 = arith.constant 0 : index
      %c0_47 = arith.constant 0 : index
      %58 = vector.load %arg5[%c0_46, %c0_47] : memref<1x128xf32, #tpu.memory_space<vmem>>, vector<1x128xf32>
      %59 = arith.mulf %57, %58 : vector<1x128xf32>
      %c0_48 = arith.constant 0 : index
      %c0_49 = arith.constant 0 : index
      %60 = vector.load %arg6[%c0_48, %c0_49] : memref<1x128xf32, #tpu.memory_space<vmem>>, vector<1x128xf32>
      %61 = arith.subf %24, %55 : vector<1x128xf32>
      %62 = arith.mulf %61, %59 : vector<1x128xf32>
      %63 = arith.addf %60, %62 : vector<1x128xf32>
      %c0_50 = arith.constant 0 : index
      %c0_51 = arith.constant 0 : index
      %c0_52 = arith.constant 0 : index
      %64 = vector.load %arg10[%c0_50, %c0_51, %c0_52] : memref<1x2x128xf32, #tpu.memory_space<vmem>>, vector<1x1x128xf32>
      %65 = vector.shape_cast %64 : vector<1x1x128xf32> to vector<1x128xf32>
      %66 = vector.shape_cast %59 : vector<1x128xf32> to vector<1x1x128xf32>
      tpu.vector_store %arg10[%c0_50, %c0_51, %c0_52], %66 {strides = array<i32>} : memref<1x2x128xf32, #tpu.memory_space<vmem>>, vector<1x1x128xf32>,
      %c0_53 = arith.constant 0 : index
      %c1 = arith.constant 1 : index
      %c0_54 = arith.constant 0 : index
      %67 = vector.load %arg10[%c0_53, %c1, %c0_54] : memref<1x2x128xf32, #tpu.memory_space<vmem>>, vector<1x1x128xf32>
      %68 = vector.shape_cast %67 : vector<1x1x128xf32> to vector<1x128xf32>
      %69 = vector.shape_cast %63 : vector<1x128xf32> to vector<1x1x128xf32>
      tpu.vector_store %arg10[%c0_53, %c1, %c0_54], %69 {strides = array<i32>} : memref<1x2x128xf32, #tpu.memory_space<vmem>>, vector<1x1x128xf32>,
    } else {
    }
    return
  }
  func.func @transform_0(%arg0: i32, %arg1: i32) -> (i32, i32, i32) {
    %c0_i32 = arith.constant 0 : i32
    %c0_i32_0 = arith.constant 0 : i32
    return %arg0, %arg1, %c0_i32 : i32, i32, i32
  }
  func.func @transform_1(%arg0: i32, %arg1: i32) -> (i32, i32) {
    %c0_i32 = arith.constant 0 : i32
    %c0_i32_0 = arith.constant 0 : i32
    %c0_i32_1 = arith.constant 0 : i32
    return %c0_i32, %c0_i32_0 : i32, i32
  }
  func.func @transform_2(%arg0: i32, %arg1: i32) -> (i32, i32) {
    %c0_i32 = arith.constant 0 : i32
    %c0_i32_0 = arith.constant 0 : i32
    %c0_i32_1 = arith.constant 0 : i32
    return %c0_i32, %c0_i32_0 : i32, i32
  }
  func.func @transform_3(%arg0: i32, %arg1: i32) -> (i32, i32) {
    %c0_i32 = arith.constant 0 : i32
    %c0_i32_0 = arith.constant 0 : i32
    %c0_i32_1 = arith.constant 0 : i32
    return %c0_i32, %c0_i32_0 : i32, i32
  }
  func.func @transform_4(%arg0: i32, %arg1: i32) -> (i32, i32) {
    %c0_i32 = arith.constant 0 : i32
    %c0_i32_0 = arith.constant 0 : i32
    %c0_i32_1 = arith.constant 0 : i32
    return %c0_i32, %c0_i32_0 : i32, i32
  }
  func.func @transform_5(%arg0: i32, %arg1: i32) -> (i32, i32) {
    %c0_i32 = arith.constant 0 : i32
    %c0_i32_0 = arith.constant 0 : i32
    %c0_i32_1 = arith.constant 0 : i32
    return %c0_i32, %c0_i32_0 : i32, i32
  }
  func.func @transform_6(%arg0: i32, %arg1: i32) -> (i32, i32) {
    %c0_i32 = arith.constant 0 : i32
    %c0_i32_0 = arith.constant 0 : i32
    %c0_i32_1 = arith.constant 0 : i32
    return %c0_i32, %c0_i32_0 : i32, i32
  }
  func.func @transform_7(%arg0: i32, %arg1: i32) -> (i32, i32, i32) {
    %c0_i32 = arith.constant 0 : i32
    %c0_i32_0 = arith.constant 0 : i32
    return %arg0, %arg1, %c0_i32 : i32, i32, i32
  }
  func.func @transform_8(%arg0: i32, %arg1: i32) -> (i32, i32, i32) {
    %c0_i32 = arith.constant 0 : i32
    %c0_i32_0 = arith.constant 0 : i32
    %c0_i32_1 = arith.constant 0 : i32
    return %arg0, %c0_i32, %c0_i32_0 : i32, i32, i32
  }
}

</mosaic_0001>

<llo_original>
// kernel: tpu_custom_call.1
$region0: #{tpu_custom_call.1}
  #allocation0 [shape = 'u32[]', space=smem, size = 0x4, offset = 0x4, fixed_abs, tag = 'smem constant byte address 0x4 - core index']
  #allocation1 [shape = 'u32[144,128]{1,0:T(1,128)}', space=vmem, size = 0x12000, scoped, tag = 'internal scratch']
  #allocation2 [shape = 'f32[1,128]{1,0:T(1,128)}', space=vmem, size = 0x200, scoped, tag = 'scratch operand']
  #allocation3 [shape = 'f32[1,128]{1,0:T(1,128)}', space=vmem, size = 0x200, scoped, tag = 'scratch operand']
  %s0 = inlined_call_operand.vmem [shape: bf16[2,256,144], index: 0, kind: input, shape index: {}]
  %s1 = inlined_call_operand.vmem [shape: bf16[144,128], index: 1, kind: input, shape index: {}]
  %s2 = inlined_call_operand.vmem [shape: f32[1,128], index: 2, kind: input, shape index: {}]
  %s3 = inlined_call_operand.vmem [shape: f32[1,128], index: 3, kind: input, shape index: {}]
  %s4 = inlined_call_operand.vmem [shape: f32[1,128], index: 4, kind: input, shape index: {}]
  %s5 = inlined_call_operand.vmem [shape: f32[128,16], index: 5, kind: input, shape index: {}]
  %s6 = inlined_call_operand.vmem [shape: f32[16,128], index: 6, kind: input, shape index: {}]
  %s7 = inlined_call_operand.hbm [shape: f32[2,256,128], index: 7, kind: output, shape index: {0}]
  %s8 = inlined_call_operand.hbm [shape: f32[2,2,128], index: 8, kind: output, shape index: {1}]
  %9 = xla_tuple %s7, %s8
  %s10 = sld [smem:[#allocation0]]
  $region77: #{tpu_custom_call.1} parent=0
    _
  %s12 = ssub.s32 1, %s10
  %s13 = scalar_select 0, %s12, %s10
  $region1: #{tpu_custom_call.1} parent=0
    #allocation4 [shape = 'u8[65536]{0}', space=vmem, size = 0x10000, scoped, tag = 'output window, operand 0']
    #allocation5 [shape = 's32[2]{0}', space=sflag, size = 0x8, scoped, tag = 'scoped memory for tpu_custom_call.1']
    #allocation6 [shape = 'u8[2048]{0}', space=vmem, size = 0x800, scoped, tag = 'output window, operand 1']
    #allocation7 [shape = 's32[2]{0}', space=sflag, size = 0x8, scoped, tag = 'scoped memory for tpu_custom_call.1']
    %14 = vsyncpa [#allocation5], 0
    %s15 = scalar_lea.sflag [#allocation5], 1
    %16 = vsyncpa %s15, 0
    %17 = vsyncpa [#allocation7], 0
    %s18 = scalar_lea.sflag [#allocation7], 1
    %19 = vsyncpa %s18, 0
    loop: start=0, step=1, limit=10
    $region2: #{tpu_custom_call.1} parent=1 // loop_pre_header
      _
    $region3: #{tpu_custom_call.1} parent=1 // loop_header
      %s21 = sphi 0, %s25
      %p22 = scmp.ge.s32.totalorder %s21, 10
      %s28 = sphi 0, %s40
      %s29 = sphi 0, %s36
      %s30 = sphi 0, %s28
      %s31 = sphi 0, %s29
      %s32 = sphi 0, %s30
      %s33 = sphi 0, %s31
      %s45 = sphi 0, %s47
      %s48 = sphi 0, %s45
      %s49 = sphi 0, %s48
      %s65 = sphi 0, %s49
      %s69 = sphi 0, %s69
      %s71 = sphi 0, %s69
      %s72 = sphi 0, %s71
      %s86 = sphi 0, %s72
      %s90 = sphi 0, %s90
      %s92 = sphi 0, %s90
      %s93 = sphi 0, %s92
      %s107 = sphi 0, %s93
      %s111 = sphi 0, %s111
      %s113 = sphi 0, %s111
      %s114 = sphi 0, %s113
      %s128 = sphi 0, %s114
      %s132 = sphi 0, %s132
      %s134 = sphi 0, %s132
      %s135 = sphi 0, %s134
      %s149 = sphi 0, %s135
      %s153 = sphi 0, %s153
      %s155 = sphi 0, %s153
      %s156 = sphi 0, %s155
      %s170 = sphi 0, %s156
      %s174 = sphi 0, %s174
      %s176 = sphi 0, %s174
      %s177 = sphi 0, %s176
      %s191 = sphi 0, %s177
      %s199 = sphi 0, %s201
      %s202 = sphi 0, %s199
      %s203 = sphi 0, %s202
      %s219 = sphi 0, %s203
      %s225 = sphi 0, %s227
      %s228 = sphi 0, %s225
      %s229 = sphi 0, %s228
      %s245 = sphi 0, %s229
    $region4: #{tpu_custom_call.1} parent=1 // loop_header_branch
      %24 = sbr.rel (%p22) target = $region8
    $region5: #{tpu_custom_call.1} parent=1 // loop_body
      %s26 = ssub.s32 %s21, 1
      %s27 = ssub.s32 %s21, 2
      %s34 = sadd.s32 1, %s29
      %p35 = scmp.ge.s32.totalorder %s34, 4
      %s36 = scalar_select %p35, 0, %s34
      %s37 = sadd.s32 1, %s28
      %s38 = scalar_select %p35, %s37, %s28
      %p39 = scmp.ge.s32.totalorder %s38, 2
      %s40 = scalar_select %p39, 0, %s38
      %s41 = ssub.s32 %s28, %s40
      %s42 = ssub.s32 %s29, %s36
      %s43 = sor.u32 %s41, %s42
      %p44 = scmp.eq.s32.totalorder %s43, 0
      %s46 = sadd.s32 %s45, 1
      %s47 = scalar_select %p44, %s45, %s46
      %p50 = pneg %p44
      %p51 = scmp.eq.s32.totalorder %s21, 7
      %p52 = por %p50, %p51
      %p53 = scmp.ne.s32.totalorder %s45, %s48
      %p54 = scmp.eq.s32.totalorder %s21, 0
      %p55 = por %p53, %p54
      %p56 = scmp.ne.s32.totalorder %s45, %s48
      %p57 = scmp.eq.s32.totalorder %s26, 7
      %p58 = por %p56, %p57
      %p59 = scmp.ne.s32.totalorder %s48, %s49
      %p60 = scmp.eq.s32.totalorder %s26, 0
      %p61 = por %p59, %p60
      %p62 = scmp.ne.s32.totalorder %s48, %s49
      %p63 = scmp.eq.s32.totalorder %s27, 7
      %p64 = por %p62, %p63
      %p66 = scmp.ne.s32.totalorder %s49, %s65
      %p67 = scmp.eq.s32.totalorder %s27, 0
      %p68 = por %p66, %p67
      %s70 = sadd.s32 %s69, 1
      %p73 = scmp.eq.s32.totalorder %s21, 7
      %p74 = scmp.ne.s32.totalorder %s69, %s71
      %p75 = scmp.eq.s32.totalorder %s21, 0
      %p76 = por %p74, %p75
      %p77 = scmp.ne.s32.totalorder %s69, %s71
      %p78 = scmp.eq.s32.totalorder %s26, 7
      %p79 = por %p77, %p78
      %p80 = scmp.ne.s32.totalorder %s71, %s72
      %p81 = scmp.eq.s32.totalorder %s26, 0
      %p82 = por %p80, %p81
      %p83 = scmp.ne.s32.totalorder %s71, %s72
      %p84 = scmp.eq.s32.totalorder %s27, 7
      %p85 = por %p83, %p84
      %p87 = scmp.ne.s32.totalorder %s72, %s86
      %p88 = scmp.eq.s32.totalorder %s27, 0
      %p89 = por %p87, %p88
      %s91 = sadd.s32 %s90, 1
      %p94 = scmp.eq.s32.totalorder %s21, 7
      %p95 = scmp.ne.s32.totalorder %s90, %s92
      %p96 = scmp.eq.s32.totalorder %s21, 0
      %p97 = por %p95, %p96
      %p98 = scmp.ne.s32.totalorder %s90, %s92
      %p99 = scmp.eq.s32.totalorder %s26, 7
      %p100 = por %p98, %p99
      %p101 = scmp.ne.s32.totalorder %s92, %s93
      %p102 = scmp.eq.s32.totalorder %s26, 0
      %p103 = por %p101, %p102
      %p104 = scmp.ne.s32.totalorder %s92, %s93
      %p105 = scmp.eq.s32.totalorder %s27, 7
      %p106 = por %p104, %p105
      %p108 = scmp.ne.s32.totalorder %s93, %s107
      %p109 = scmp.eq.s32.totalorder %s27, 0
      %p110 = por %p108, %p109
      %s112 = sadd.s32 %s111, 1
      %p115 = scmp.eq.s32.totalorder %s21, 7
      %p116 = scmp.ne.s32.totalorder %s111, %s113
      %p117 = scmp.eq.s32.totalorder %s21, 0
      %p118 = por %p116, %p117
      %p119 = scmp.ne.s32.totalorder %s111, %s113
      %p120 = scmp.eq.s32.totalorder %s26, 7
      %p121 = por %p119, %p120
      %p122 = scmp.ne.s32.totalorder %s113, %s114
      %p123 = scmp.eq.s32.totalorder %s26, 0
      %p124 = por %p122, %p123
      %p125 = scmp.ne.s32.totalorder %s113, %s114
      %p126 = scmp.eq.s32.totalorder %s27, 7
      %p127 = por %p125, %p126
      %p129 = scmp.ne.s32.totalorder %s114, %s128
      %p130 = scmp.eq.s32.totalorder %s27, 0
      %p131 = por %p129, %p130
      %s133 = sadd.s32 %s132, 1
      %p136 = scmp.eq.s32.totalorder %s21, 7
      %p137 = scmp.ne.s32.totalorder %s132, %s134
      %p138 = scmp.eq.s32.totalorder %s21, 0
      %p139 = por %p137, %p138
      %p140 = scmp.ne.s32.totalorder %s132, %s134
      %p141 = scmp.eq.s32.totalorder %s26, 7
      %p142 = por %p140, %p141
      %p143 = scmp.ne.s32.totalorder %s134, %s135
      %p144 = scmp.eq.s32.totalorder %s26, 0
      %p145 = por %p143, %p144
      %p146 = scmp.ne.s32.totalorder %s134, %s135
      %p147 = scmp.eq.s32.totalorder %s27, 7
      %p148 = por %p146, %p147
      %p150 = scmp.ne.s32.totalorder %s135, %s149
      %p151 = scmp.eq.s32.totalorder %s27, 0
      %p152 = por %p150, %p151
      %s154 = sadd.s32 %s153, 1
      %p157 = scmp.eq.s32.totalorder %s21, 7
      %p158 = scmp.ne.s32.totalorder %s153, %s155
      %p159 = scmp.eq.s32.totalorder %s21, 0
      %p160 = por %p158, %p159
      %p161 = scmp.ne.s32.totalorder %s153, %s155
      %p162 = scmp.eq.s32.totalorder %s26, 7
      %p163 = por %p161, %p162
      %p164 = scmp.ne.s32.totalorder %s155, %s156
      %p165 = scmp.eq.s32.totalorder %s26, 0
      %p166 = por %p164, %p165
      %p167 = scmp.ne.s32.totalorder %s155, %s156
      %p168 = scmp.eq.s32.totalorder %s27, 7
      %p169 = por %p167, %p168
      %p171 = scmp.ne.s32.totalorder %s156, %s170
      %p172 = scmp.eq.s32.totalorder %s27, 0
      %p173 = por %p171, %p172
      %s175 = sadd.s32 %s174, 1
      %p178 = scmp.eq.s32.totalorder %s21, 7
      %p179 = scmp.ne.s32.totalorder %s174, %s176
      %p180 = scmp.eq.s32.totalorder %s21, 0
      %p181 = por %p179, %p180
      %p182 = scmp.ne.s32.totalorder %s174, %s176
      %p183 = scmp.eq.s32.totalorder %s26, 7
      %p184 = por %p182, %p183
      %p185 = scmp.ne.s32.totalorder %s176, %s177
      %p186 = scmp.eq.s32.totalorder %s26, 0
      %p187 = por %p185, %p186
      %p188 = scmp.ne.s32.totalorder %s176, %s177
      %p189 = scmp.eq.s32.totalorder %s27, 7
      %p190 = por %p188, %p189
      %p192 = scmp.ne.s32.totalorder %s177, %s191
      %p193 = scmp.eq.s32.totalorder %s27, 0
      %p194 = por %p192, %p193
      %s195 = ssub.s32 %s28, %s40
      %s196 = ssub.s32 %s29, %s36
      %s197 = sor.u32 %s195, %s196
      %p198 = scmp.eq.s32.totalorder %s197, 0
      %s200 = sadd.s32 %s199, 1
      %s201 = scalar_select %p198, %s199, %s200
      %p204 = pneg %p198
      %p205 = scmp.eq.s32.totalorder %s21, 7
      %p206 = por %p204, %p205
      %p207 = scmp.ne.s32.totalorder %s199, %s202
      %p208 = scmp.eq.s32.totalorder %s21, 0
      %p209 = por %p207, %p208
      %p210 = scmp.ne.s32.totalorder %s199, %s202
      %p211 = scmp.eq.s32.totalorder %s26, 7
      %p212 = por %p210, %p211
      %p213 = scmp.ne.s32.totalorder %s202, %s203
      %p214 = scmp.eq.s32.totalorder %s26, 0
      %p215 = por %p213, %p214
      %p216 = scmp.ne.s32.totalorder %s202, %s203
      %p217 = scmp.eq.s32.totalorder %s27, 7
      %p218 = por %p216, %p217
      %p220 = scmp.ne.s32.totalorder %s203, %s219
      %p221 = scmp.eq.s32.totalorder %s27, 0
      %p222 = por %p220, %p221
      %s223 = ssub.s32 %s28, %s40
      %p224 = scmp.eq.s32.totalorder %s223, 0
      %s226 = sadd.s32 %s225, 1
      %s227 = scalar_select %p224, %s225, %s226
      %p230 = pneg %p224
      %p231 = scmp.eq.s32.totalorder %s21, 7
      %p232 = por %p230, %p231
      %p233 = scmp.ne.s32.totalorder %s225, %s228
      %p234 = scmp.eq.s32.totalorder %s21, 0
      %p235 = por %p233, %p234
      %p236 = scmp.ne.s32.totalorder %s225, %s228
      %p237 = scmp.eq.s32.totalorder %s26, 7
      %p238 = por %p236, %p237
      %p239 = scmp.ne.s32.totalorder %s228, %s229
      %p240 = scmp.eq.s32.totalorder %s26, 0
      %p241 = por %p239, %p240
      %p242 = scmp.ne.s32.totalorder %s228, %s229
      %p243 = scmp.eq.s32.totalorder %s27, 7
      %p244 = por %p242, %p243
      %p246 = scmp.ne.s32.totalorder %s229, %s245
      %p247 = scmp.eq.s32.totalorder %s27, 0
      %p248 = por %p246, %p247
      %p249 = scmp.le.s32.totalorder 1, %s21
      %p250 = scmp.lt.s32.totalorder %s21, 9
      %p251 = pnand %p249, %p250
      %p252 = pneg %p251
      // Predicated region
      $region9: #{tpu_custom_call.1} parent=5 // pred_check
        _
      $region10: #{tpu_custom_call.1} parent=5 // pred_check_branch
        %254 = sbr.rel (%p251) target = $region12
      $region11: #{tpu_custom_call.1} parent=5 // pred_region
        %s255 = ssub.s32 %s21, 1
        // Predicated region
        $region13: #{tpu_custom_call.1} parent=11 // pred_check
          %p256 = pneg %p82
        $region14: #{tpu_custom_call.1} parent=11 // pred_check_branch
          %258 = sbr.rel (%p256) target = $region16
        $region15: #{tpu_custom_call.1} parent=11 // pred_region
          _
        $region16: #{tpu_custom_call.1} parent=11 // pred_fallthru
          _
        // Predicated region
        $region17: #{tpu_custom_call.1} parent=11 // pred_check
          %p259 = pneg %p103
        $region18: #{tpu_custom_call.1} parent=11 // pred_check_branch
          %261 = sbr.rel (%p259) target = $region20
        $region19: #{tpu_custom_call.1} parent=11 // pred_region
          _
        $region20: #{tpu_custom_call.1} parent=11 // pred_fallthru
          _
        // Predicated region
        $region21: #{tpu_custom_call.1} parent=11 // pred_check
          %p262 = pneg %p124
        $region22: #{tpu_custom_call.1} parent=11 // pred_check_branch
          %264 = sbr.rel (%p262) target = $region24
        $region23: #{tpu_custom_call.1} parent=11 // pred_region
          _
        $region24: #{tpu_custom_call.1} parent=11 // pred_fallthru
          _
        // Predicated region
        $region25: #{tpu_custom_call.1} parent=11 // pred_check
          %p265 = pneg %p145
        $region26: #{tpu_custom_call.1} parent=11 // pred_check_branch
          %267 = sbr.rel (%p265) target = $region28
        $region27: #{tpu_custom_call.1} parent=11 // pred_region
          _
        $region28: #{tpu_custom_call.1} parent=11 // pred_fallthru
          _
        // Predicated region
        $region29: #{tpu_custom_call.1} parent=11 // pred_check
          %p268 = pneg %p166
        $region30: #{tpu_custom_call.1} parent=11 // pred_check_branch
          %270 = sbr.rel (%p268) target = $region32
        $region31: #{tpu_custom_call.1} parent=11 // pred_region
          _
        $region32: #{tpu_custom_call.1} parent=11 // pred_fallthru
          _
        // Predicated region
        $region33: #{tpu_custom_call.1} parent=11 // pred_check
          %p271 = pneg %p187
        $region34: #{tpu_custom_call.1} parent=11 // pred_check_branch
          %273 = sbr.rel (%p271) target = $region36
        $region35: #{tpu_custom_call.1} parent=11 // pred_region
          _
        $region36: #{tpu_custom_call.1} parent=11 // pred_fallthru
          _
      $region12: #{tpu_custom_call.1} parent=5 // pred_fallthru
        _
      %p274 = scmp.lt.s32.totalorder %s21, 8
      // Predicated region
      $region37: #{tpu_custom_call.1} parent=5 // pred_check
        %p275 = pneg %p274
      $region38: #{tpu_custom_call.1} parent=5 // pred_check_branch
        %277 = sbr.rel (%p275) target = $region40
      $region39: #{tpu_custom_call.1} parent=5 // pred_region
        // Predicated region
        $region41: #{tpu_custom_call.1} parent=39 // pred_check
          %p278 = pneg %p55
        $region42: #{tpu_custom_call.1} parent=39 // pred_check_branch
          %280 = sbr.rel (%p278) target = $region44
        $region43: #{tpu_custom_call.1} parent=39 // pred_region
          %s281 = smul.u32 8, %s29
          %p282 = scmp.lt.s32.totalorder %s28, 1
          %s283 = scalar_select %p282, %s28, 1
          %p284 = scmp.lt.s32.totalorder %s281, 31
          %s285 = scalar_select %p284, %s281, 31
          %s286 = smul.addr %s285, 2
          %s287 = smul.addr %s283, 64
          %s288 = sadd.s32 %s286, %s287
          %s289 = smul.addr %s288, 4
          %s290 = scalar_lea.vmem %s0, %s289
          %s291 = smul.u32 8, %s29
        $region44: #{tpu_custom_call.1} parent=39 // pred_fallthru
          _
      $region40: #{tpu_custom_call.1} parent=5 // pred_fallthru
        _
      %p292 = scmp.le.s32.totalorder 1, %s21
      %p293 = scmp.lt.s32.totalorder %s21, 9
      %p294 = pnand %p292, %p293
      %p295 = pneg %p294
      // Predicated region
      $region45: #{tpu_custom_call.1} parent=5 // pred_check
        _
      $region46: #{tpu_custom_call.1} parent=5 // pred_check_branch
        %297 = sbr.rel (%p294) target = $region48
      $region47: #{tpu_custom_call.1} parent=5 // pred_region
        %s298 = ssub.s32 %s21, 1
        %s299 = smul.u32 8, %s31
        %p300 = scmp.lt.s32.totalorder %s30, 1
        %s301 = scalar_select %p300, %s30, 1
        %p302 = scmp.lt.s32.totalorder %s299, 31
        %s303 = scalar_select %p302, %s299, 31
        %s304 = smul.addr %s303, 2
        %s305 = smul.addr %s301, 64
        %s306 = sadd.s32 %s304, %s305
        %s307 = smul.addr %s306, 4
        %s308 = scalar_lea.vmem %s0, %s307
        %p309 = pneg %p61
        %p310 = pneg %p58
        %p311 = pneg %p82
        %p312 = pneg %p79
        %p313 = pneg %p103
        %p314 = pneg %p100
        %p315 = pneg %p124
        %p316 = pneg %p121
        %p317 = pneg %p145
        %p318 = pneg %p142
        %p319 = pneg %p166
        %p320 = pneg %p163
        %p321 = pneg %p187
        %p322 = pneg %p184
        %p323 = pneg %p215
        %p324 = pneg %p212
        %s325 = sand.u32 %s202, 1
        %s326 = scalar_lea.sflag [#allocation5], %s325
        %s327 = sand.u32 %s202, 1
        %s328 = smul.addr %s327, 64
        %s329 = scalar_lea.vmem [#allocation4], %s328
        %p330 = pneg %p241
        %p331 = pneg %p238
        %s332 = sand.u32 %s228, 1
        %s333 = scalar_lea.sflag [#allocation7], %s332
        %s334 = sand.u32 %s228, 1
        %s335 = smul.addr %s334, 2
        %s336 = scalar_lea.vmem [#allocation6], %s335
        %s337 = smul.u32 8, %s31
        %p338 = scmp.lt.s32.totalorder %s30, 1
        %s339 = scalar_select %p338, %s30, 1
        %p340 = scmp.lt.s32.totalorder %s337, 31
        %s341 = scalar_select %p340, %s337, 31
        %s342 = smul.addr %s341, 2
        %s343 = smul.addr %s339, 64
        %s344 = sadd.s32 %s342, %s343
        %s345 = smul.addr %s344, 4
        %s346 = scalar_lea.vmem %s0, %s345
        %s347 = smul.u32 8, %s31
        %s348 = smul.u32 8, %s31
        %p350 = scmp.eq.s32.totalorder %s31, 0
        // Predicated region
        $region49: #{tpu_custom_call.1} parent=47 // pred_check
          %p351 = pneg %p350
        $region50: #{tpu_custom_call.1} parent=47 // pred_check_branch
          %353 = sbr.rel (%p351) target = $region52
        $region51: #{tpu_custom_call.1} parent=47 // pred_region
          %354 = vst [vmem:[#allocation2] sm:$0x1] 0.0
          %355 = vst [vmem:[#allocation3] sm:$0x1] 0.0
        $region52: #{tpu_custom_call.1} parent=47 // pred_fallthru
          _
        %v356 = vld [vmem:[%s346] sm:$0xff]
        %v357 = vld [vmem:[%s346 + $0x8] sm:$0xff]
        %v358 = vld [vmem:[%s346 + $0x10] sm:$0xff]
        %v359 = vld [vmem:[%s346 + $0x18] sm:$0xff]
        %v360 = vld [vmem:[%s346 + $0x20] sm:$0xff]
        %v361 = vld [vmem:[%s346 + $0x28] sm:$0xff]
        %v362 = vld [vmem:[%s346 + $0x30] sm:$0xff]
        %v363 = vld [vmem:[%s346 + $0x38] sm:$0xff]
        %v364 = vld [vmem:[%s1] sm:$0xf]
        %v365 = vld [vmem:[%s1 + $0x4] sm:$0xf]
        %v366 = vld [vmem:[%s1 + $0x8] sm:$0xf]
        %v367 = vld [vmem:[%s1 + $0xc] sm:$0xf]
        %v368 = vld [vmem:[%s1 + $0x10] sm:$0xf]
        %v369 = vld [vmem:[%s1 + $0x14] sm:$0xf]
        %v370 = vld [vmem:[%s1 + $0x18] sm:$0xf]
        %v371 = vld [vmem:[%s1 + $0x1c] sm:$0xf]
        %v372 = vld [vmem:[%s1 + $0x20] sm:$0xf]
        %v373 = vld [vmem:[%s1 + $0x24] sm:$0xf]
        %v374 = vld [vmem:[%s1 + $0x28] sm:$0xf]
        %v375 = vld [vmem:[%s1 + $0x2c] sm:$0xf]
        %v376 = vld [vmem:[%s1 + $0x30] sm:$0xf]
        %v377 = vld [vmem:[%s1 + $0x34] sm:$0xf]
        %v378 = vld [vmem:[%s1 + $0x38] sm:$0xf]
        %v379 = vld [vmem:[%s1 + $0x3c] sm:$0xf]
        %v380 = vld [vmem:[%s1 + $0x40] sm:$0xf]
        %v381 = vld [vmem:[%s1 + $0x44] sm:$0xf]
        %v390 = vunpack.c.l.b16 %v356
        %v391 = vunpack.c.h.b16 %v356
        %v392 = vunpack.c.l.b16 %v357
        %v393 = vunpack.c.h.b16 %v357
        %v394 = vunpack.c.l.b16 %v358
        %v395 = vunpack.c.h.b16 %v358
        %v396 = vunpack.c.l.b16 %v359
        %v397 = vunpack.c.h.b16 %v359
        %v398 = vunpack.c.l.b16 %v360
        %v399 = vunpack.c.h.b16 %v360
        %v400 = vunpack.c.l.b16 %v361
        %v401 = vunpack.c.h.b16 %v361
        %v402 = vunpack.c.l.b16 %v362
        %v403 = vunpack.c.h.b16 %v362
        %v404 = vunpack.c.l.b16 %v363
        %v405 = vunpack.c.h.b16 %v363
        %v406 = vpack.c.b16 %v392, %v390
        %v407 = vpack.c.b16 %v393, %v391
        %v408 = vpack.c.b16 %v396, %v394
        %v409 = vpack.c.b16 %v397, %v395
        %v410 = vpack.c.b16 %v400, %v398
        %v411 = vpack.c.b16 %v401, %v399
        %v412 = vpack.c.b16 %v404, %v402
        %v413 = vpack.c.b16 %v405, %v403
        %v436 = vunpack.c.l.b16 %v364
        %v437 = vunpack.c.l.b16 %v365
        %v438 = vunpack.c.l.b16 %v366
        %v439 = vunpack.c.l.b16 %v367
        %v440 = vunpack.c.l.b16 %v368
        %v441 = vunpack.c.l.b16 %v369
        %v442 = vunpack.c.l.b16 %v370
        %v443 = vunpack.c.l.b16 %v371
        %v444 = vunpack.c.l.b16 %v372
        %v445 = vunpack.c.l.b16 %v373
        %v446 = vunpack.c.l.b16 %v374
        %v447 = vunpack.c.l.b16 %v375
        %v448 = vunpack.c.l.b16 %v376
        %v449 = vunpack.c.l.b16 %v377
        %v450 = vunpack.c.l.b16 %v378
        %v451 = vunpack.c.l.b16 %v379
        %v452 = vunpack.c.l.b16 %v380
        %v453 = vunpack.c.l.b16 %v381
        %v454 = vpack.c.b16 %v437, %v436
        %v455 = vpack.c.b16 %v439, %v438
        %v456 = vpack.c.b16 %v441, %v440
        %v457 = vpack.c.b16 %v443, %v442
        %v458 = vpack.c.b16 %v445, %v444
        %v459 = vpack.c.b16 %v447, %v446
        %v460 = vpack.c.b16 %v449, %v448
        %v461 = vpack.c.b16 %v451, %v450
        %v462 = vpack.c.b16 %v453, %v452
        %vm472 = vcmask 130048
        %v474 = vsel %vm472, %v407, 0
        %v477 = vsel %vm472, %v409, 0
        %v480 = vsel %vm472, %v411, 0
        %v483 = vsel %vm472, %v413, 0
        %485 = vmatprep.subr.bf16.mxu0 0
        %486 = vmatpush1.bf16.msra.mxu0 %v461
        %487 = vmatprep.subr.bf16.mxu0 0
        %488 = vmatpush1.bf16.msra.mxu0 %v460
        %489 = vmatprep.subr.bf16.mxu0 0
        %490 = vmatpush1.bf16.msra.mxu0 %v459
        %491 = vmatprep.subr.bf16.mxu0 0
        %492 = vmatpush1.bf16.msra.mxu0 %v458
        %493 = vmatprep.subr.bf16.mxu0 0
        %494 = vmatpush1.bf16.msra.mxu0 %v457
        %495 = vmatprep.subr.bf16.mxu0 0
        %496 = vmatpush1.bf16.msra.mxu0 %v456
        %497 = vmatprep.subr.bf16.mxu0 0
        %498 = vmatpush1.bf16.msra.mxu0 %v455
        %499 = vmatprep.subr.bf16.mxu0 0
        %500 = vmatpush1.bf16.msra.mxu0 %v454
        %501 = vmatprep.subr.bf16.mxu0 0
        %502 = vmatpush2.bf16.msra.mxu0 0
        %503 = vmatprep.subr.bf16.mxu0 0
        %504 = vmatpush2.bf16.msra.mxu0 0
        %505 = vmatprep.subr.bf16.mxu0 0
        %506 = vmatpush2.bf16.msra.mxu0 0
        %507 = vmatprep.subr.bf16.mxu0 0
        %508 = vmatpush2.bf16.msra.mxu0 0
        %509 = vmatprep.subr.bf16.mxu0 0
        %510 = vmatpush2.bf16.msra.mxu0 0
        %511 = vmatprep.subr.bf16.mxu0 0
        %512 = vmatpush2.bf16.msra.mxu0 0
        %513 = vmatprep.subr.bf16.mxu0 0
        %514 = vmatpush2.bf16.msra.mxu0 0
        %515 = vmatprep.subr.bf16.mxu0 0
        %516 = vmatpush2.bf16.msra.mxu0 %v462
        %517 = vmatprep.mubr.bf16.mxu0 %v474
        %518 = vmatmul.mubr.bf16.gmra.mxu0 %v406
        %v519 = vpop.f32.mrf.mxu0
        %v520 = vadd.f32 0.0, %v519
        %v521 = vpop.f32.mrf.mxu0
        %v522 = vpop.f32.mrf.mxu0
        %v523 = vadd.f32 0.0, %v522
        %v524 = vpop.f32.mrf.mxu0
        %525 = vmatprep.mubr.bf16.mxu0 %v477
        %526 = vmatmul.mubr.bf16.gmra.mxu0 %v408
        %v527 = vpop.f32.mrf.mxu0
        %v528 = vadd.f32 0.0, %v527
        %v529 = vpop.f32.mrf.mxu0
        %v530 = vpop.f32.mrf.mxu0
        %v531 = vadd.f32 0.0, %v530
        %v532 = vpop.f32.mrf.mxu0
        %533 = vmatprep.mubr.bf16.mxu0 %v480
        %534 = vmatmul.mubr.bf16.gmra.mxu0 %v410
        %v535 = vpop.f32.mrf.mxu0
        %v536 = vadd.f32 0.0, %v535
        %v537 = vpop.f32.mrf.mxu0
        %v538 = vpop.f32.mrf.mxu0
        %v539 = vadd.f32 0.0, %v538
        %v540 = vpop.f32.mrf.mxu0
        %541 = vmatprep.mubr.bf16.mxu0 %v483
        %542 = vmatmul.mubr.bf16.gmra.mxu0 %v412
        %v543 = vpop.f32.mrf.mxu0
        %v544 = vadd.f32 0.0, %v543
        %v545 = vpop.f32.mrf.mxu0
        %v546 = vpop.f32.mrf.mxu0
        %v547 = vadd.f32 0.0, %v546
        %v548 = vpop.f32.mrf.mxu0
        %549 = vdwg.mxu0
        %v550 = vld [vmem:[#allocation2] sm:$0x1]
        %v551 = vadd.f32 %v520, %v523
        %v552 = vadd.f32 %v551, %v528
        %v553 = vadd.f32 %v552, %v531
        %v554 = vadd.f32 %v553, %v536
        %v555 = vadd.f32 %v554, %v539
        %v556 = vadd.f32 %v555, %v544
        %v557 = vadd.f32 %v556, %v547
        %v558 = vrot.slane %v557, 4
        %v559 = vadd.f32 %v557, %v558
        %v560 = vrot.slane %v559, 2
        %v561 = vadd.f32 %v559, %v560
        %v562 = vrot.slane %v561, 1
        %v563 = vadd.f32 %v561, %v562
        %v564 = vadd.f32 %v550, %v563
        %565 = vst [vmem:[#allocation2] sm:$0x1] %v564
        %v566 = vld [vmem:[#allocation3] sm:$0x1]
        %v567 = vmul.f32 %v520, %v520
        %v568 = vmul.f32 %v523, %v523
        %v569 = vmul.f32 %v528, %v528
        %v570 = vmul.f32 %v531, %v531
        %v571 = vmul.f32 %v536, %v536
        %v572 = vmul.f32 %v539, %v539
        %v573 = vmul.f32 %v544, %v544
        %v574 = vmul.f32 %v547, %v547
        %v575 = vadd.f32 %v567, %v568
        %v576 = vadd.f32 %v575, %v569
        %v577 = vadd.f32 %v576, %v570
        %v578 = vadd.f32 %v577, %v571
        %v579 = vadd.f32 %v578, %v572
        %v580 = vadd.f32 %v579, %v573
        %v581 = vadd.f32 %v580, %v574
        %v582 = vrot.slane %v581, 4
        %v583 = vadd.f32 %v581, %v582
        %v584 = vrot.slane %v583, 2
        %v585 = vadd.f32 %v583, %v584
        %v586 = vrot.slane %v585, 1
        %v587 = vadd.f32 %v585, %v586
        %v588 = vadd.f32 %v566, %v587
        %589 = vst [vmem:[#allocation3] sm:$0x1] %v588
        %590 = vst [vmem:[%s329] sm:$0xff] %v520
        %591 = vst [vmem:[%s329 + $0x8] sm:$0xff] %v523
        %592 = vst [vmem:[%s329 + $0x10] sm:$0xff] %v528
        %593 = vst [vmem:[%s329 + $0x18] sm:$0xff] %v531
        %594 = vst [vmem:[%s329 + $0x20] sm:$0xff] %v536
        %595 = vst [vmem:[%s329 + $0x28] sm:$0xff] %v539
        %596 = vst [vmem:[%s329 + $0x30] sm:$0xff] %v544
        %597 = vst [vmem:[%s329 + $0x38] sm:$0xff] %v547
        %p598 = scmp.eq.s32.totalorder %s31, 3
        // Predicated region
        $region53: #{tpu_custom_call.1} parent=47 // pred_check
          %p599 = pneg %p598
        $region54: #{tpu_custom_call.1} parent=47 // pred_check_branch
          %601 = sbr.rel (%p599) target = $region56
        $region55: #{tpu_custom_call.1} parent=47 // pred_region
          %v602 = vld [vmem:[%s2] sm:$0x1]
          %v603 = vld [vmem:[#allocation2] sm:$0x1]
          %v604 = vmul.f32 %v602, 256.0
          %v605 = vadd.f32 %v603, %v604
          %v606 = vld [vmem:[#allocation3] sm:$0x1]
          %v607 = vmul.f32 %v602, 2.0
          %v608 = vmul.f32 %v607, %v603
          %v609 = vadd.f32 %v606, %v608
          %v610 = vmul.f32 %v602, %v602
          %v611 = vmul.f32 %v610, 256.0
          %v612 = vadd.f32 %v609, %v611
          %v613 = vld [vmem:[%s5] sm:$0xff]
          %v614 = vld [vmem:[%s5 + $0x8] sm:$0xff]
          %v615 = vld [vmem:[%s5 + $0x10] sm:$0xff]
          %v616 = vld [vmem:[%s5 + $0x18] sm:$0xff]
          %v617 = vld [vmem:[%s5 + $0x20] sm:$0xff]
          %v618 = vld [vmem:[%s5 + $0x28] sm:$0xff]
          %v619 = vld [vmem:[%s5 + $0x30] sm:$0xff]
          %v620 = vld [vmem:[%s5 + $0x38] sm:$0xff]
          %v621 = vld [vmem:[%s5 + $0x40] sm:$0xff]
          %v622 = vld [vmem:[%s5 + $0x48] sm:$0xff]
          %v623 = vld [vmem:[%s5 + $0x50] sm:$0xff]
          %v624 = vld [vmem:[%s5 + $0x58] sm:$0xff]
          %v625 = vld [vmem:[%s5 + $0x60] sm:$0xff]
          %v626 = vld [vmem:[%s5 + $0x68] sm:$0xff]
          %v627 = vld [vmem:[%s5 + $0x70] sm:$0xff]
          %v628 = vld [vmem:[%s5 + $0x78] sm:$0xff]
          %629 = vmatprep.subr.mxu0 0.0
          %630 = vmatpush1.msra.mxu0 %v628
          %631 = vmatprep.subr.mxu0 0.0
          %632 = vmatpush1.msra.mxu0 %v627
          %633 = vmatprep.subr.mxu0 0.0
          %634 = vmatpush1.msra.mxu0 %v626
          %635 = vmatprep.subr.mxu0 0.0
          %636 = vmatpush1.msra.mxu0 %v625
          %637 = vmatprep.subr.mxu0 0.0
          %638 = vmatpush1.msra.mxu0 %v624
          %639 = vmatprep.subr.mxu0 0.0
          %640 = vmatpush1.msra.mxu0 %v623
          %641 = vmatprep.subr.mxu0 0.0
          %642 = vmatpush1.msra.mxu0 %v622
          %643 = vmatprep.subr.mxu0 0.0
          %644 = vmatpush1.msra.mxu0 %v621
          %645 = vmatprep.subr.mxu0 0.0
          %646 = vmatpush1.msra.mxu0 %v620
          %647 = vmatprep.subr.mxu0 0.0
          %648 = vmatpush1.msra.mxu0 %v619
          %649 = vmatprep.subr.mxu0 0.0
          %650 = vmatpush1.msra.mxu0 %v618
          %651 = vmatprep.subr.mxu0 0.0
          %652 = vmatpush1.msra.mxu0 %v617
          %653 = vmatprep.subr.mxu0 0.0
          %654 = vmatpush1.msra.mxu0 %v616
          %655 = vmatprep.subr.mxu0 0.0
          %656 = vmatpush1.msra.mxu0 %v615
          %657 = vmatprep.subr.mxu0 0.0
          %658 = vmatpush1.msra.mxu0 %v614
          %659 = vmatprep.subr.mxu0 0.0
          %660 = vmatpush1.msra.mxu0 %v613
          %661 = vmatprep.subr.mxu0 0.0
          %662 = vmatpush2.msra.mxu0 0.0
          %663 = vmatprep.subr.mxu0 0.0
          %664 = vmatpush2.msra.mxu0 0.0
          %665 = vmatprep.subr.mxu0 0.0
          %666 = vmatpush2.msra.mxu0 0.0
          %667 = vmatprep.subr.mxu0 0.0
          %668 = vmatpush2.msra.mxu0 0.0
          %669 = vmatprep.subr.mxu0 0.0
          %670 = vmatpush2.msra.mxu0 0.0
          %671 = vmatprep.subr.mxu0 0.0
          %672 = vmatpush2.msra.mxu0 0.0
          %673 = vmatprep.subr.mxu0 0.0
          %674 = vmatpush2.msra.mxu0 0.0
          %675 = vmatprep.subr.mxu0 0.0
          %676 = vmatpush2.msra.mxu0 0.0
          %677 = vmatprep.subr.mxu0 0.0
          %678 = vmatpush2.msra.mxu0 0.0
          %679 = vmatprep.subr.mxu0 0.0
          %680 = vmatpush2.msra.mxu0 0.0
          %681 = vmatprep.subr.mxu0 0.0
          %682 = vmatpush2.msra.mxu0 0.0
          %683 = vmatprep.subr.mxu0 0.0
          %684 = vmatpush2.msra.mxu0 0.0
          %685 = vmatprep.subr.mxu0 0.0
          %686 = vmatpush2.msra.mxu0 0.0
          %687 = vmatprep.subr.mxu0 0.0
          %688 = vmatpush2.msra.mxu0 0.0
          %689 = vmatprep.subr.mxu0 0.0
          %690 = vmatpush2.msra.mxu0 0.0
          %691 = vmatprep.subr.mxu0 0.0
          %692 = vmatpush2.msra.mxu0 0.0
          %693 = vmatprep.mubr.f32.mxu0 0.0
          %694 = vmatmul.mubr.f32.gmra.mxu0 %v605
          %v695 = vpop.f32.mrf.mxu0
          %v696 = vadd.f32 0.0, %v695
          %v697 = vpop.f32.mrf.mxu0
          %698 = vdwg.mxu0
          %699 = vmatprep.subr.mxu0 0.0
          %700 = vmatpush1.msra.mxu0 %v628
          %701 = vmatprep.subr.mxu0 0.0
          %702 = vmatpush1.msra.mxu0 %v627
          %703 = vmatprep.subr.mxu0 0.0
          %704 = vmatpush1.msra.mxu0 %v626
          %705 = vmatprep.subr.mxu0 0.0
          %706 = vmatpush1.msra.mxu0 %v625
          %707 = vmatprep.subr.mxu0 0.0
          %708 = vmatpush1.msra.mxu0 %v624
          %709 = vmatprep.subr.mxu0 0.0
          %710 = vmatpush1.msra.mxu0 %v623
          %711 = vmatprep.subr.mxu0 0.0
          %712 = vmatpush1.msra.mxu0 %v622
          %713 = vmatprep.subr.mxu0 0.0
          %714 = vmatpush1.msra.mxu0 %v621
          %715 = vmatprep.subr.mxu0 0.0
          %716 = vmatpush1.msra.mxu0 %v620
          %717 = vmatprep.subr.mxu0 0.0
          %718 = vmatpush1.msra.mxu0 %v619
          %719 = vmatprep.subr.mxu0 0.0
          %720 = vmatpush1.msra.mxu0 %v618
          %721 = vmatprep.subr.mxu0 0.0
          %722 = vmatpush1.msra.mxu0 %v617
          %723 = vmatprep.subr.mxu0 0.0
          %724 = vmatpush1.msra.mxu0 %v616
          %725 = vmatprep.subr.mxu0 0.0
          %726 = vmatpush1.msra.mxu0 %v615
          %727 = vmatprep.subr.mxu0 0.0
          %728 = vmatpush1.msra.mxu0 %v614
          %729 = vmatprep.subr.mxu0 0.0
          %730 = vmatpush1.msra.mxu0 %v613
          %731 = vmatprep.subr.mxu0 0.0
          %732 = vmatpush2.msra.mxu0 0.0
          %733 = vmatprep.subr.mxu0 0.0
          %734 = vmatpush2.msra.mxu0 0.0
          %735 = vmatprep.subr.mxu0 0.0
          %736 = vmatpush2.msra.mxu0 0.0
          %737 = vmatprep.subr.mxu0 0.0
          %738 = vmatpush2.msra.mxu0 0.0
          %739 = vmatprep.subr.mxu0 0.0
          %740 = vmatpush2.msra.mxu0 0.0
          %741 = vmatprep.subr.mxu0 0.0
          %742 = vmatpush2.msra.mxu0 0.0
          %743 = vmatprep.subr.mxu0 0.0
          %744 = vmatpush2.msra.mxu0 0.0
          %745 = vmatprep.subr.mxu0 0.0
          %746 = vmatpush2.msra.mxu0 0.0
          %747 = vmatprep.subr.mxu0 0.0
          %748 = vmatpush2.msra.mxu0 0.0
          %749 = vmatprep.subr.mxu0 0.0
          %750 = vmatpush2.msra.mxu0 0.0
          %751 = vmatprep.subr.mxu0 0.0
          %752 = vmatpush2.msra.mxu0 0.0
          %753 = vmatprep.subr.mxu0 0.0
          %754 = vmatpush2.msra.mxu0 0.0
          %755 = vmatprep.subr.mxu0 0.0
          %756 = vmatpush2.msra.mxu0 0.0
          %757 = vmatprep.subr.mxu0 0.0
          %758 = vmatpush2.msra.mxu0 0.0
          %759 = vmatprep.subr.mxu0 0.0
          %760 = vmatpush2.msra.mxu0 0.0
          %761 = vmatprep.subr.mxu0 0.0
          %762 = vmatpush2.msra.mxu0 0.0
          %763 = vmatprep.mubr.f32.mxu0 0.0
          %764 = vmatmul.mubr.f32.gmra.mxu0 %v612
          %v765 = vpop.f32.mrf.mxu0
          %v766 = vadd.f32 0.0, %v765
          %v767 = vpop.f32.mrf.mxu0
          %768 = vdwg.mxu0
          %v769 = vrcp.pop 512.0
          %v770 = vmul.f32 %v696, %v769
          %v771 = vmul.f32 %v766, %v769
          %v772 = vmul.f32 %v770, %v770
          %v773 = vsub.f32 %v771, %v772
          %v774 = vmax.f32 %v773, 0.0
          %v775 = vadd.f32 %v774, 1e-05
          %v776 = vrsqrt.pop %v775
          %v777 = vld [vmem:[%s6] sm:$0xff]
          %v778 = vld [vmem:[%s6 + $0x8] sm:$0xff]
          %v780 = vsel %vm472, %v770, 0
          %782 = vmatprep.subr.mxu0 0.0
          %783 = vmatpush1.msra.mxu0 0.0
          %784 = vmatprep.subr.mxu0 0.0
          %785 = vmatpush1.msra.mxu0 0.0
          %786 = vmatprep.subr.mxu0 0.0
          %787 = vmatpush1.msra.mxu0 0.0
          %788 = vmatprep.subr.mxu0 0.0
          %789 = vmatpush1.msra.mxu0 0.0
          %790 = vmatprep.subr.mxu0 0.0
          %791 = vmatpush1.msra.mxu0 0.0
          %792 = vmatprep.subr.mxu0 0.0
          %793 = vmatpush1.msra.mxu0 0.0
          %794 = vmatprep.subr.mxu0 0.0
          %795 = vmatpush1.msra.mxu0 0.0
          %796 = vmatprep.subr.mxu0 0.0
          %797 = vmatpush1.msra.mxu0 0.0
          %798 = vmatprep.subr.mxu0 0.0
          %799 = vmatpush1.msra.mxu0 0.0
          %800 = vmatprep.subr.mxu0 0.0
          %801 = vmatpush1.msra.mxu0 0.0
          %802 = vmatprep.subr.mxu0 0.0
          %803 = vmatpush1.msra.mxu0 0.0
          %804 = vmatprep.subr.mxu0 0.0
          %805 = vmatpush1.msra.mxu0 0.0
          %806 = vmatprep.subr.mxu0 0.0
          %807 = vmatpush1.msra.mxu0 0.0
          %808 = vmatprep.subr.mxu0 0.0
          %809 = vmatpush1.msra.mxu0 0.0
          %810 = vmatprep.subr.mxu0 0.0
          %811 = vmatpush1.msra.mxu0 %v778
          %812 = vmatprep.subr.mxu0 0.0
          %813 = vmatpush1.msra.mxu0 %v777
          %814 = vmatprep.subr.mxu0 0.0
          %815 = vmatpush2.msra.mxu0 0.0
          %816 = vmatprep.subr.mxu0 0.0
          %817 = vmatpush2.msra.mxu0 0.0
          %818 = vmatprep.subr.mxu0 0.0
          %819 = vmatpush2.msra.mxu0 0.0
          %820 = vmatprep.subr.mxu0 0.0
          %821 = vmatpush2.msra.mxu0 0.0
          %822 = vmatprep.subr.mxu0 0.0
          %823 = vmatpush2.msra.mxu0 0.0
          %824 = vmatprep.subr.mxu0 0.0
          %825 = vmatpush2.msra.mxu0 0.0
          %826 = vmatprep.subr.mxu0 0.0
          %827 = vmatpush2.msra.mxu0 0.0
          %828 = vmatprep.subr.mxu0 0.0
          %829 = vmatpush2.msra.mxu0 0.0
          %830 = vmatprep.subr.mxu0 0.0
          %831 = vmatpush2.msra.mxu0 0.0
          %832 = vmatprep.subr.mxu0 0.0
          %833 = vmatpush2.msra.mxu0 0.0
          %834 = vmatprep.subr.mxu0 0.0
          %835 = vmatpush2.msra.mxu0 0.0
          %836 = vmatprep.subr.mxu0 0.0
          %837 = vmatpush2.msra.mxu0 0.0
          %838 = vmatprep.subr.mxu0 0.0
          %839 = vmatpush2.msra.mxu0 0.0
          %840 = vmatprep.subr.mxu0 0.0
          %841 = vmatpush2.msra.mxu0 0.0
          %842 = vmatprep.subr.mxu0 0.0
          %843 = vmatpush2.msra.mxu0 0.0
          %844 = vmatprep.subr.mxu0 0.0
          %845 = vmatpush2.msra.mxu0 0.0
          %846 = vmatprep.mubr.f32.mxu0 0.0
          %847 = vmatmul.mubr.f32.gmra.mxu0 %v780
          %v848 = vpop.f32.mrf.mxu0
          %v849 = vadd.f32 0.0, %v848
          %v850 = vpop.f32.mrf.mxu0
          %851 = vdwg.mxu0
          %v853 = vsel %vm472, %v776, 0
          %855 = vmatprep.subr.mxu0 0.0
          %856 = vmatpush1.msra.mxu0 0.0
          %857 = vmatprep.subr.mxu0 0.0
          %858 = vmatpush1.msra.mxu0 0.0
          %859 = vmatprep.subr.mxu0 0.0
          %860 = vmatpush1.msra.mxu0 0.0
          %861 = vmatprep.subr.mxu0 0.0
          %862 = vmatpush1.msra.mxu0 0.0
          %863 = vmatprep.subr.mxu0 0.0
          %864 = vmatpush1.msra.mxu0 0.0
          %865 = vmatprep.subr.mxu0 0.0
          %866 = vmatpush1.msra.mxu0 0.0
          %867 = vmatprep.subr.mxu0 0.0
          %868 = vmatpush1.msra.mxu0 0.0
          %869 = vmatprep.subr.mxu0 0.0
          %870 = vmatpush1.msra.mxu0 0.0
          %871 = vmatprep.subr.mxu0 0.0
          %872 = vmatpush1.msra.mxu0 0.0
          %873 = vmatprep.subr.mxu0 0.0
          %874 = vmatpush1.msra.mxu0 0.0
          %875 = vmatprep.subr.mxu0 0.0
          %876 = vmatpush1.msra.mxu0 0.0
          %877 = vmatprep.subr.mxu0 0.0
          %878 = vmatpush1.msra.mxu0 0.0
          %879 = vmatprep.subr.mxu0 0.0
          %880 = vmatpush1.msra.mxu0 0.0
          %881 = vmatprep.subr.mxu0 0.0
          %882 = vmatpush1.msra.mxu0 0.0
          %883 = vmatprep.subr.mxu0 0.0
          %884 = vmatpush1.msra.mxu0 %v778
          %885 = vmatprep.subr.mxu0 0.0
          %886 = vmatpush1.msra.mxu0 %v777
          %887 = vmatprep.subr.mxu0 0.0
          %888 = vmatpush2.msra.mxu0 0.0
          %889 = vmatprep.subr.mxu0 0.0
          %890 = vmatpush2.msra.mxu0 0.0
          %891 = vmatprep.subr.mxu0 0.0
          %892 = vmatpush2.msra.mxu0 0.0
          %893 = vmatprep.subr.mxu0 0.0
          %894 = vmatpush2.msra.mxu0 0.0
          %895 = vmatprep.subr.mxu0 0.0
          %896 = vmatpush2.msra.mxu0 0.0
          %897 = vmatprep.subr.mxu0 0.0
          %898 = vmatpush2.msra.mxu0 0.0
          %899 = vmatprep.subr.mxu0 0.0
          %900 = vmatpush2.msra.mxu0 0.0
          %901 = vmatprep.subr.mxu0 0.0
          %902 = vmatpush2.msra.mxu0 0.0
          %903 = vmatprep.subr.mxu0 0.0
          %904 = vmatpush2.msra.mxu0 0.0
          %905 = vmatprep.subr.mxu0 0.0
          %906 = vmatpush2.msra.mxu0 0.0
          %907 = vmatprep.subr.mxu0 0.0
          %908 = vmatpush2.msra.mxu0 0.0
          %909 = vmatprep.subr.mxu0 0.0
          %910 = vmatpush2.msra.mxu0 0.0
          %911 = vmatprep.subr.mxu0 0.0
          %912 = vmatpush2.msra.mxu0 0.0
          %913 = vmatprep.subr.mxu0 0.0
          %914 = vmatpush2.msra.mxu0 0.0
          %915 = vmatprep.subr.mxu0 0.0
          %916 = vmatpush2.msra.mxu0 0.0
          %917 = vmatprep.subr.mxu0 0.0
          %918 = vmatpush2.msra.mxu0 0.0
          %919 = vmatprep.mubr.f32.mxu0 0.0
          %920 = vmatmul.mubr.f32.gmra.mxu0 %v853
          %v921 = vpop.f32.mrf.mxu0
          %v922 = vadd.f32 0.0, %v921
          %v923 = vpop.f32.mrf.mxu0
          %924 = vdwg.mxu0
          %v925 = vld [vmem:[%s3] sm:$0x1]
          %v926 = vmul.f32 %v922, %v925
          %v927 = vld [vmem:[%s4] sm:$0x1]
          %v928 = vsub.f32 %v602, %v849
          %v929 = vmul.f32 %v928, %v926
          %v930 = vadd.f32 %v927, %v929
          %931 = vst [vmem:[%s336] sm:$0x1] %v926
          %932 = vst [vmem:[%s336 + $0x1] sm:$0x1] %v930
        $region56: #{tpu_custom_call.1} parent=47 // pred_fallthru
          _
        %s933 = sand.u32 %s202, 1
        %s934 = scalar_lea.sflag [#allocation5], %s933
        %s935 = sand.u32 %s202, 1
        %s936 = smul.addr %s935, 64
        %s937 = scalar_lea.vmem [#allocation4], %s936
        %s938 = sand.u32 %s228, 1
        %s939 = scalar_lea.sflag [#allocation7], %s938
        %s940 = sand.u32 %s228, 1
        %s941 = smul.addr %s940, 2
        %s942 = scalar_lea.vmem [#allocation6], %s941
        // Predicated region
        $region57: #{tpu_custom_call.1} parent=47 // pred_check
          %p943 = pneg %p212
        $region58: #{tpu_custom_call.1} parent=47 // pred_check_branch
          %945 = sbr.rel (%p943) target = $region60
        $region59: #{tpu_custom_call.1} parent=47 // pred_region
          %s946 = smul.u32 8, %s31
          %s948 = ssub.s32 1024, 1024
          %949 = vsyncadd %s934, %s948
          %s950 = smul.addr %s30, 32
          %s951 = sadd.s32 %s946, %s950
          %s952 = smul.addr %s951, 128
          %s953 = scalar_lea.hbm %s7, %s952
          %s954 = sshll.u32 %s937, 4
          %s955 = int_to_ptr.vmem [resolvable:$true] %s954
          %960 = dma.vmem_to_hbm [thread:$0]  %s955, 1024, %s953, %s934, 128, 128, 8
        $region60: #{tpu_custom_call.1} parent=47 // pred_fallthru
          _
        // Predicated region
        $region61: #{tpu_custom_call.1} parent=47 // pred_check
          %p961 = pneg %p238
        $region62: #{tpu_custom_call.1} parent=47 // pred_check_branch
          %963 = sbr.rel (%p961) target = $region64
        $region63: #{tpu_custom_call.1} parent=47 // pred_region
          %s965 = ssub.s32 32, 32
          %966 = vsyncadd %s939, %s965
          %s967 = smul.addr %s30, 32
          %s968 = scalar_lea.hbm %s8, %s967
          %s970 = sshll.u32 %s942, 4
          %s971 = int_to_ptr.vmem [resolvable:$true] %s970
          %973 = dma.vmem_to_hbm [thread:$0]  %s971, 32, %s968, %s939
        $region64: #{tpu_custom_call.1} parent=47 // pred_fallthru
          _
      $region48: #{tpu_custom_call.1} parent=5 // pred_fallthru
        _
      %p974 = scmp.le.s32.totalorder 2, %s21
      // Predicated region
      $region65: #{tpu_custom_call.1} parent=5 // pred_check
        %p975 = pneg %p974
      $region66: #{tpu_custom_call.1} parent=5 // pred_check_branch
        %977 = sbr.rel (%p975) target = $region68
      $region67: #{tpu_custom_call.1} parent=5 // pred_region
        %s978 = ssub.s32 %s21, 2
        // Predicated region
        $region69: #{tpu_custom_call.1} parent=67 // pred_check
          %p979 = pneg %p218
        $region70: #{tpu_custom_call.1} parent=67 // pred_check_branch
          %981 = sbr.rel (%p979) target = $region72
        $region71: #{tpu_custom_call.1} parent=67 // pred_region
          %s982 = sand.u32 %s203, 1
          %s983 = scalar_lea.sflag [#allocation5], %s982
          %s984 = sand.u32 %s203, 1
          %s985 = smul.addr %s984, 64
          %s986 = scalar_lea.vmem [#allocation4], %s985
          %987 = dma.done %s983, 1024
        $region72: #{tpu_custom_call.1} parent=67 // pred_fallthru
          _
        // Predicated region
        $region73: #{tpu_custom_call.1} parent=67 // pred_check
          %p988 = pneg %p244
        $region74: #{tpu_custom_call.1} parent=67 // pred_check_branch
          %990 = sbr.rel (%p988) target = $region76
        $region75: #{tpu_custom_call.1} parent=67 // pred_region
          %s991 = sand.u32 %s229, 1
          %s992 = scalar_lea.sflag [#allocation7], %s991
          %s993 = sand.u32 %s229, 1
          %s994 = smul.addr %s993, 2
          %s995 = scalar_lea.vmem [#allocation6], %s994
          %996 = dma.done %s992, 32
        $region76: #{tpu_custom_call.1} parent=67 // pred_fallthru
          _
      $region68: #{tpu_custom_call.1} parent=5 // pred_fallthru
        _
    $region6: #{tpu_custom_call.1} parent=1 // loop_footer
      %s25 = sadd.s32 1, %s21
    $region7: #{tpu_custom_call.1} parent=1 // loop_footer_branch
      %20 = sbr.rel target = $region3
    $region8: #{tpu_custom_call.1} parent=1 // loop_exit
      _
    %997 = vsyncpa [#allocation5], 1
    %s998 = scalar_lea.sflag [#allocation5], 1
    %999 = vsyncpa %s998, 1
    %1000 = vsyncpa [#allocation7], 1
    %s1001 = scalar_lea.sflag [#allocation7], 1
    %1002 = vsyncpa %s1001, 1

</llo_original>
